<compile_context>
chip_gen: v5e
topology: v5e:2x2
jax: 0.10.0
libtpu: 0.0.40
codegen_flags: <defaults>
</compile_context>

<pallas_src>
import functools

import jax
import jax.numpy as jnp
from jax.experimental import pallas as pl
from jax.experimental.pallas import tpu as pltpu


def _simclr_rows_kernel(z_rows_ref, z_all_ref, loss_ref, *,
                        batch, tile_rows, scale, normalize):
    """Computes the per-row NT-Xent loss for one tile of rows of Z=[z_i; z_j]."""
    i = pl.program_id(0)

    # Note: if inputs are bf16 the matmul could consume bf16 directly
    # (preferred_element_type=f32); demo inputs are f32 so we keep f32 math.
    zr = z_rows_ref[...].astype(jnp.float32)   # (TM, D)  rows of this tile
    za = z_all_ref[...].astype(jnp.float32)    # (2B, D)  all rows (columns of S)

    s_fold = jnp.float32(scale)                # sqrt(1/temperature)
    if normalize:
        # F.normalize: x / max(||x||, 1e-12)  ==  x * min(rsqrt(sum x^2), 1e12)
        inv_r = jnp.minimum(jax.lax.rsqrt(jnp.sum(zr * zr, axis=-1, keepdims=True)),
                            jnp.float32(1e12))
        inv_a = jnp.minimum(jax.lax.rsqrt(jnp.sum(za * za, axis=-1, keepdims=True)),
                            jnp.float32(1e12))
        zr = zr * (inv_r * s_fold)
        za = za * (inv_a * s_fold)
    else:
        zr = zr * s_fold
        za = za * s_fold

    # (TM, 2B) tile of the stacked similarity matrix S = (Z Z^T) / T
    # (temperature already folded into the embeddings above).
    s = jax.lax.dot_general(zr, za, (((1,), (1,)), ((), ())),
                            preferred_element_type=jnp.float32)

    # Global row / column indices for masking.
    row = i * tile_rows + jax.lax.broadcasted_iota(jnp.int32, s.shape, 0)
    col = jax.lax.broadcasted_iota(jnp.int32, s.shape, 1)
    partner = jnp.where(row < batch, row + batch, row - batch)

    # Positive logit = S[row, partner]  (== diag(ab) for view-A rows, diag(ba)
    # for view-B rows; they are equal, so it is computed exactly once per row).
    pos = jnp.sum(jnp.where(col == partner, s, 0.0), axis=-1, keepdims=True)

    # Denominator: every entry of the row except the self-similarity.
    s_neg = jnp.where(col == row, -jnp.inf, s)
    m = jnp.max(s_neg, axis=-1, keepdims=True)
    lse = m + jnp.log(jnp.sum(jnp.exp(s_neg - m), axis=-1, keepdims=True))

    # Per-row cross-entropy with the positive as the target class.
    loss_ref[...] = lse - pos


def _pick_row_tile(n_rows):
    """Largest row tile (multiple of the f32 sublane tile 8) dividing 2B that
    still yields >= 2 grid steps; falls back to a single full-size tile."""
    for cand in (256, 128, 64, 32, 16, 8):
        if n_rows % cand == 0 and n_rows // cand >= 2:
            return cand
    return n_rows


def simclr_loss_pallas(z_i, z_j, *, temperature=1.0, normalize=True):
    """NT-Xent loss between two (B, D) views; returns a scalar float32."""
    B, D = z_i.shape
    n = 2 * B
    z = jnp.concatenate([z_i, z_j], axis=0)          # (2B, D) stacked views

    row_tile = _pick_row_tile(n)
    n_tiles = n // row_tile
    scale = float(temperature) ** -0.5               # fold 1/T into embeddings

    kernel = functools.partial(
        _simclr_rows_kernel,
        batch=B, tile_rows=row_tile, scale=scale, normalize=bool(normalize),
    )

    per_row = pl.pallas_call(
        kernel,
        out_shape=jax.ShapeDtypeStruct((n, 1), jnp.float32),
        grid=(n_tiles,),
        in_specs=[
            pl.BlockSpec((row_tile, D), lambda i: (i, 0)),   # row tile of Z
            pl.BlockSpec((n, D), lambda i: (0, 0)),          # full Z (columns)
        ],
        out_specs=pl.BlockSpec((row_tile, 1), lambda i: (i, 0)),
        compiler_params=pltpu.CompilerParams(
            dimension_semantics=("parallel",)),               # v7x: 2 TCs split rows
    )(z, z)

    return jnp.sum(per_row) / jnp.float32(n)


def _simclr_loss_ref(z_i, z_j, *, temperature=1.0, normalize=True):
    """Pure-JAX reference with identical semantics (for verification)."""
    if normalize:
        z_i = z_i / jnp.maximum(jnp.linalg.norm(z_i, axis=-1, keepdims=True), 1e-12)
        z_j = z_j / jnp.maximum(jnp.linalg.norm(z_j, axis=-1, keepdims=True), 1e-12)
    inv_t = 1.0 / temperature
    aa = z_i @ z_i.T * inv_t
    bb = z_j @ z_j.T * inv_t
    ab = z_i @ z_j.T * inv_t
    ba = z_j @ z_i.T * inv_t
    bsz = aa.shape[0]
    eye = jnp.eye(bsz, dtype=bool)
    aa_m = jnp.where(eye, -jnp.inf, aa)
    bb_m = jnp.where(eye, -jnp.inf, bb)
    pos_a = jnp.diag(ab)
    pos_b = jnp.diag(ba)
    lse_a = jax.scipy.special.logsumexp(jnp.concatenate([ab, aa_m], axis=-1), axis=-1)
    lse_b = jax.scipy.special.logsumexp(jnp.concatenate([ba, bb_m], axis=-1), axis=-1)
    return (jnp.sum(lse_a - pos_a) + jnp.sum(lse_b - pos_b)) / (2 * bsz)


if __name__ == "__main__":
    key = jax.random.PRNGKey(0)

    # Small demo shape consistent with the module (B=8 samples, D=32 features).
    batch_size, feat_dim, temperature = 8, 32, 0.5
    k_i, k_j, k_a, k_b = jax.random.split(key, 4)
    z_i = jax.random.normal(k_i, (batch_size, feat_dim), dtype=jnp.float32)
    z_j = jax.random.normal(k_j, (batch_size, feat_dim), dtype=jnp.float32)

    loss = jax.block_until_ready(
        simclr_loss_pallas(z_i, z_j, temperature=temperature, normalize=True))
    loss_ref = _simclr_loss_ref(z_i, z_j, temperature=temperature, normalize=True)
    assert jnp.allclose(loss, loss_ref, rtol=1e-5, atol=1e-5), (loss, loss_ref)

    # normalize=False path.
    loss2 = jax.block_until_ready(
        simclr_loss_pallas(z_i, z_j, temperature=1.0, normalize=False))
    loss2_ref = _simclr_loss_ref(z_i, z_j, temperature=1.0, normalize=False)
    assert jnp.allclose(loss2, loss2_ref, rtol=1e-5, atol=1e-5), (loss2, loss2_ref)

    # Larger, multi-tile case (2B=128 rows -> 2 tiles of 64).
    z_a = jax.random.normal(k_a, (64, 128), dtype=jnp.float32)
    z_b = jax.random.normal(k_b, (64, 128), dtype=jnp.float32)
    loss3 = jax.block_until_ready(
        simclr_loss_pallas(z_a, z_b, temperature=0.1, normalize=True))
    loss3_ref = _simclr_loss_ref(z_a, z_b, temperature=0.1, normalize=True)
    assert jnp.allclose(loss3, loss3_ref, rtol=1e-5, atol=1e-5), (loss3, loss3_ref)

    print("KERNEL_OK")
</pallas_src>

<mosaic_0001>
module attributes {stable_mosaic.version = 11 : i64} {
  func.func @_simclr_rows_kernel(%arg0: i32, %arg1: memref<8x32xf32, #tpu.memory_space<vmem>>, %arg2: memref<16x32xf32, #tpu.memory_space<vmem>>, %arg3: memref<8x1xf32, #tpu.memory_space<vmem>>) attributes {dimension_semantics = [#tpu.dimension_semantics<parallel>], iteration_bounds = array<i64: 2>, scalar_prefetch = 0 : i64, scratch_operands = 0 : i64, tpu.core_type = #tpu.core_type<tc>, window_params = [{transform_indices = @transform_0, window_bounds = array<i64: 8, 32>}, {pipeline_mode = #tpu.pipeline_mode<synchronous>, transform_indices = @transform_1, window_bounds = array<i64: 16, 32>}, {transform_indices = @transform_2, window_bounds = array<i64: 8, 1>}]} {
    %c0 = arith.constant 0 : index
    %c0_0 = arith.constant 0 : index
    %0 = vector.load %arg1[%c0, %c0_0] : memref<8x32xf32, #tpu.memory_space<vmem>>, vector<8x32xf32>
    %c0_1 = arith.constant 0 : index
    %c0_2 = arith.constant 0 : index
    %1 = vector.load %arg2[%c0_1, %c0_2] : memref<16x32xf32, #tpu.memory_space<vmem>>, vector<16x32xf32>
    %2 = arith.mulf %0, %0 : vector<8x32xf32>
    %cst = arith.constant dense<0.000000e+00> : vector<8xf32>
    %3 = vector.multi_reduction <add>, %2, %cst [1] : vector<8x32xf32> to vector<8xf32>
    %4 = vector.shape_cast %3 : vector<8xf32> to vector<8x1xf32>
    %5 = math.rsqrt %4 : vector<8x1xf32>
    %cst_3 = arith.constant 9.99999995E+11 : f32
    %6 = vector.broadcast %cst_3 : f32 to vector<8x1xf32>
    %7 = arith.minimumf %5, %6 : vector<8x1xf32>
    %8 = arith.mulf %1, %1 : vector<16x32xf32>
    %cst_4 = arith.constant dense<0.000000e+00> : vector<16xf32>
    %9 = vector.multi_reduction <add>, %8, %cst_4 [1] : vector<16x32xf32> to vector<16xf32>
    %10 = vector.shape_cast %9 : vector<16xf32> to vector<16x1xf32>
    %11 = math.rsqrt %10 : vector<16x1xf32>
    %cst_5 = arith.constant 9.99999995E+11 : f32
    %12 = vector.broadcast %cst_5 : f32 to vector<16x1xf32>
    %13 = arith.minimumf %11, %12 : vector<16x1xf32>
    %cst_6 = arith.constant 1.41421354 : f32
    %14 = vector.broadcast %cst_6 : f32 to vector<8x1xf32>
    %15 = arith.mulf %7, %14 : vector<8x1xf32>
    %16 = vector.broadcast %15 : vector<8x1xf32> to vector<8x32xf32>
    %17 = arith.mulf %0, %16 : vector<8x32xf32>
    %cst_7 = arith.constant 1.41421354 : f32
    %18 = vector.broadcast %cst_7 : f32 to vector<16x1xf32>
    %19 = arith.mulf %13, %18 : vector<16x1xf32>
    %20 = vector.broadcast %19 : vector<16x1xf32> to vector<16x32xf32>
    %21 = arith.mulf %1, %20 : vector<16x32xf32>
    %cst_8 = arith.constant dense<0.000000e+00> : vector<8x16xf32>
    %22 = tpu.matmul %17, %21, %cst_8 {dimension_numbers = #tpu.dot_dimension_numbers<[1], [1], [0], [0], [0, 0, 1, 0], [], []>} : vector<8x32xf32>, vector<16x32xf32>, vector<8x16xf32> -> vector<8x16xf32>
    %c8_i32 = arith.constant 8 : i32
    %23 = arith.muli %arg0, %c8_i32 : i32
    %24 = tpu.iota {dimensions = array<i32: 0>} : vector<8x16xi32>
    %25 = vector.broadcast %23 : i32 to vector<8x16xi32>
    %26 = arith.addi %25, %24 : vector<8x16xi32>
    %27 = tpu.iota {dimensions = array<i32: 1>} : vector<8x16xi32>
    %c8_i32_9 = arith.constant 8 : i32
    %28 = vector.broadcast %c8_i32_9 : i32 to vector<8x16xi32>
    %29 = arith.cmpi slt, %26, %28 : vector<8x16xi32>
    %c8_i32_10 = arith.constant 8 : i32
    %30 = vector.broadcast %c8_i32_10 : i32 to vector<8x16xi32>
    %31 = arith.addi %26, %30 : vector<8x16xi32>
    %c8_i32_11 = arith.constant 8 : i32
    %32 = vector.broadcast %c8_i32_11 : i32 to vector<8x16xi32>
    %33 = arith.subi %26, %32 : vector<8x16xi32>
    %34 = arith.select %29, %31, %33 : vector<8x16xi1>, vector<8x16xi32>
    %35 = arith.cmpi eq, %27, %34 : vector<8x16xi32>
    %cst_12 = arith.constant 0.000000e+00 : f32
    %36 = vector.broadcast %cst_12 : f32 to vector<8x16xf32>
    %37 = arith.select %35, %22, %36 : vector<8x16xi1>, vector<8x16xf32>
    %cst_13 = arith.constant dense<0.000000e+00> : vector<8xf32>
    %38 = vector.multi_reduction <add>, %37, %cst_13 [1] : vector<8x16xf32> to vector<8xf32>
    %39 = vector.shape_cast %38 : vector<8xf32> to vector<8x1xf32>
    %40 = arith.cmpi eq, %27, %26 : vector<8x16xi32>
    %cst_14 = arith.constant 0xFF800000 : f32
    %41 = vector.broadcast %cst_14 : f32 to vector<8x16xf32>
    %42 = arith.select %40, %41, %22 : vector<8x16xi1>, vector<8x16xf32>
    %cst_15 = arith.constant dense<0xFF800000> : vector<8xf32>
    %43 = vector.multi_reduction <maximumf>, %42, %cst_15 [1] : vector<8x16xf32> to vector<8xf32>
    %44 = vector.shape_cast %43 : vector<8xf32> to vector<8x1xf32>
    %45 = vector.broadcast %44 : vector<8x1xf32> to vector<8x16xf32>
    %46 = arith.subf %42, %45 : vector<8x16xf32>
    %47 = math.exp %46 : vector<8x16xf32>
    %cst_16 = arith.constant dense<0.000000e+00> : vector<8xf32>
    %48 = vector.multi_reduction <add>, %47, %cst_16 [1] : vector<8x16xf32> to vector<8xf32>
    %49 = vector.shape_cast %48 : vector<8xf32> to vector<8x1xf32>
    %50 = math.log %49 : vector<8x1xf32>
    %51 = arith.addf %44, %50 : vector<8x1xf32>
    %52 = arith.subf %51, %39 : vector<8x1xf32>
    %c0_17 = arith.constant 0 : index
    %c0_18 = arith.constant 0 : index
    %53 = vector.load %arg3[%c0_17, %c0_18] : memref<8x1xf32, #tpu.memory_space<vmem>>, vector<8x1xf32>
    tpu.vector_store %arg3[%c0_17, %c0_18], %52 {strides = array<i32>} : memref<8x1xf32, #tpu.memory_space<vmem>>, vector<8x1xf32>,
    return
  }
  func.func @transform_0(%arg0: i32) -> (i32, i32) {
    %c0_i32 = arith.constant 0 : i32
    %c0_i32_0 = arith.constant 0 : i32
    return %arg0, %c0_i32 : i32, i32
  }
  func.func @transform_1(%arg0: i32) -> (i32, i32) {
    %c0_i32 = arith.constant 0 : i32
    %c0_i32_0 = arith.constant 0 : i32
    %c0_i32_1 = arith.constant 0 : i32
    return %c0_i32, %c0_i32_0 : i32, i32
  }
  func.func @transform_2(%arg0: i32) -> (i32, i32) {
    %c0_i32 = arith.constant 0 : i32
    %c0_i32_0 = arith.constant 0 : i32
    return %arg0, %c0_i32 : i32, i32
  }
}

</mosaic_0001>

<llo_original>
// kernel: tpu_custom_call.1
$region0: #{tpu_custom_call.1}
  #allocation0 [shape = 'u32[]', space=smem, size = 0x4, offset = 0x4, fixed_abs, tag = 'smem constant byte address 0x4 - core index']
  #allocation1 [shape = 'u32[72,128]{1,0:T(1,128)}', space=vmem, size = 0x9000, scoped, tag = 'internal scratch']
  %s0 = inlined_call_operand.hbm [shape: f32[16,32], index: 0, kind: input, shape index: {}]
  %s1 = inlined_call_operand.hbm [shape: f32[16,32], index: 1, kind: input, shape index: {}]
  %s2 = inlined_call_operand.vmem [shape: f32[16,1], index: 2, kind: output, shape index: {}]
  %s3 = sld [smem:[#allocation0]]
  $region49: #{tpu_custom_call.1} parent=0
    _
  %s5 = ssub.s32 1, %s3
  %s6 = scalar_select 0, %s5, %s3
  $region1: #{tpu_custom_call.1} parent=0
    #allocation2 [shape = 'u8[8192]{0}', space=vmem, size = 0x2000, scoped, tag = 'input window, operand 0']
    #allocation3 [shape = 's32[2]{0}', space=sflag, size = 0x8, scoped, tag = 'scoped memory for tpu_custom_call.1']
    #allocation4 [shape = 'u8[8192]{0}', space=vmem, size = 0x2000, scoped, tag = 'input window, operand 1, single buffered']
    #allocation5 [shape = 's32[1]{0}', space=sflag, size = 0x4, scoped, tag = 'scoped memory for tpu_custom_call.1']
    %7 = vsyncpa [#allocation3], 0
    %s8 = scalar_lea.sflag [#allocation3], 1
    %9 = vsyncpa %s8, 0
    %10 = vsyncpa [#allocation5], 0
    loop: start=0, step=1, limit=4
    $region2: #{tpu_custom_call.1} parent=1 // loop_pre_header
      _
    $region3: #{tpu_custom_call.1} parent=1 // loop_header
      %s12 = sphi 0, %s16
      %p13 = scmp.ge.s32.totalorder %s12, 4
      %s22 = sphi 0, %s24
      %s25 = sphi 0, %s22
      %s26 = sphi 0, %s25
      %s42 = sphi 0, %s26
      %s46 = sphi 0, %s46
      %s48 = sphi 0, %s46
      %s49 = sphi 0, %s48
      %s63 = sphi 0, %s49
      %s69 = sphi 0, %s71
      %s72 = sphi 0, %s69
      %s73 = sphi 0, %s72
      %s89 = sphi 0, %s73
    $region4: #{tpu_custom_call.1} parent=1 // loop_header_branch
      %15 = sbr.rel (%p13) target = $region8
    $region5: #{tpu_custom_call.1} parent=1 // loop_body
      %s17 = ssub.s32 %s12, 1
      %s18 = ssub.s32 %s12, 2
      %s19 = sadd.s32 %s12, 1
      %s20 = ssub.s32 %s12, %s19
      %p21 = scmp.eq.s32.totalorder %s20, 0
      %s23 = sadd.s32 %s22, 1
      %s24 = scalar_select %p21, %s22, %s23
      %p27 = pneg %p21
      %p28 = scmp.eq.s32.totalorder %s12, 1
      %p29 = por %p27, %p28
      %p30 = scmp.ne.s32.totalorder %s22, %s25
      %p31 = scmp.eq.s32.totalorder %s12, 0
      %p32 = por %p30, %p31
      %p33 = scmp.ne.s32.totalorder %s22, %s25
      %p34 = scmp.eq.s32.totalorder %s17, 1
      %p35 = por %p33, %p34
      %p36 = scmp.ne.s32.totalorder %s25, %s26
      %p37 = scmp.eq.s32.totalorder %s17, 0
      %p38 = por %p36, %p37
      %p39 = scmp.ne.s32.totalorder %s25, %s26
      %p40 = scmp.eq.s32.totalorder %s18, 1
      %p41 = por %p39, %p40
      %p43 = scmp.ne.s32.totalorder %s26, %s42
      %p44 = scmp.eq.s32.totalorder %s18, 0
      %p45 = por %p43, %p44
      %s47 = sadd.s32 %s46, 1
      %p50 = scmp.eq.s32.totalorder %s12, 1
      %p51 = scmp.ne.s32.totalorder %s46, %s48
      %p52 = scmp.eq.s32.totalorder %s12, 0
      %p53 = por %p51, %p52
      %p54 = scmp.ne.s32.totalorder %s46, %s48
      %p55 = scmp.eq.s32.totalorder %s17, 1
      %p56 = por %p54, %p55
      %p57 = scmp.ne.s32.totalorder %s48, %s49
      %p58 = scmp.eq.s32.totalorder %s17, 0
      %p59 = por %p57, %p58
      %p60 = scmp.ne.s32.totalorder %s48, %s49
      %p61 = scmp.eq.s32.totalorder %s18, 1
      %p62 = por %p60, %p61
      %p64 = scmp.ne.s32.totalorder %s49, %s63
      %p65 = scmp.eq.s32.totalorder %s18, 0
      %p66 = por %p64, %p65
      %s67 = ssub.s32 %s12, %s19
      %p68 = scmp.eq.s32.totalorder %s67, 0
      %s70 = sadd.s32 %s69, 1
      %s71 = scalar_select %p68, %s69, %s70
      %p74 = pneg %p68
      %p75 = scmp.eq.s32.totalorder %s12, 1
      %p76 = por %p74, %p75
      %p77 = scmp.ne.s32.totalorder %s69, %s72
      %p78 = scmp.eq.s32.totalorder %s12, 0
      %p79 = por %p77, %p78
      %p80 = scmp.ne.s32.totalorder %s69, %s72
      %p81 = scmp.eq.s32.totalorder %s17, 1
      %p82 = por %p80, %p81
      %p83 = scmp.ne.s32.totalorder %s72, %s73
      %p84 = scmp.eq.s32.totalorder %s17, 0
      %p85 = por %p83, %p84
      %p86 = scmp.ne.s32.totalorder %s72, %s73
      %p87 = scmp.eq.s32.totalorder %s18, 1
      %p88 = por %p86, %p87
      %p90 = scmp.ne.s32.totalorder %s73, %s89
      %p91 = scmp.eq.s32.totalorder %s18, 0
      %p92 = por %p90, %p91
      %p93 = scmp.le.s32.totalorder 1, %s12
      %p94 = scmp.lt.s32.totalorder %s12, 3
      %p95 = pnand %p93, %p94
      %p96 = pneg %p95
      // Predicated region
      $region9: #{tpu_custom_call.1} parent=5 // pred_check
        _
      $region10: #{tpu_custom_call.1} parent=5 // pred_check_branch
        %98 = sbr.rel (%p95) target = $region12
      $region11: #{tpu_custom_call.1} parent=5 // pred_region
        %s99 = ssub.s32 %s12, 1
        // Predicated region
        $region13: #{tpu_custom_call.1} parent=11 // pred_check
          %p100 = pneg %p59
        $region14: #{tpu_custom_call.1} parent=11 // pred_check_branch
          %102 = sbr.rel (%p100) target = $region16
        $region15: #{tpu_custom_call.1} parent=11 // pred_region
          %104 = vsyncadd [#allocation5], 0
          %s105 = sshll.u32 %s1, 4
          %s106 = int_to_ptr.hbm [resolvable:$true] %s105
          %s107 = sshll.u32 [#allocation4], 4
          %s108 = int_to_ptr.vmem [resolvable:$true] %s107
          %113 = dma.hbm_to_vmem [thread:$0]  %s106, 256, %s108, [#allocation5], 128, 128, 8
        $region16: #{tpu_custom_call.1} parent=11 // pred_fallthru
          _
      $region12: #{tpu_custom_call.1} parent=5 // pred_fallthru
        _
      %p114 = scmp.lt.s32.totalorder %s12, 2
      // Predicated region
      $region17: #{tpu_custom_call.1} parent=5 // pred_check
        %p115 = pneg %p114
      $region18: #{tpu_custom_call.1} parent=5 // pred_check_branch
        %117 = sbr.rel (%p115) target = $region20
      $region19: #{tpu_custom_call.1} parent=5 // pred_region
        // Predicated region
        $region21: #{tpu_custom_call.1} parent=19 // pred_check
          %p118 = pneg %p32
        $region22: #{tpu_custom_call.1} parent=19 // pred_check_branch
          %120 = sbr.rel (%p118) target = $region24
        $region23: #{tpu_custom_call.1} parent=19 // pred_region
          %s121 = sand.u32 %s22, 1
          %s122 = scalar_lea.sflag [#allocation3], %s121
          %s123 = sand.u32 %s22, 1
          %s124 = smul.addr %s123, 8
          %s125 = scalar_lea.vmem [#allocation2], %s124
          %127 = vsyncadd %s122, 0
          %s128 = smul.addr %s12, 8
          %s129 = scalar_lea.hbm %s0, %s128
          %s131 = sshll.u32 %s129, 4
          %s132 = int_to_ptr.hbm [resolvable:$true] %s131
          %s133 = sshll.u32 %s125, 4
          %s134 = int_to_ptr.vmem [resolvable:$true] %s133
          %136 = dma.hbm_to_vmem [thread:$0]  %s132, 128, %s134, %s122
        $region24: #{tpu_custom_call.1} parent=19 // pred_fallthru
          _
      $region20: #{tpu_custom_call.1} parent=5 // pred_fallthru
        _
      %p137 = scmp.le.s32.totalorder 1, %s12
      %p138 = scmp.lt.s32.totalorder %s12, 3
      %p139 = pnand %p137, %p138
      %p140 = pneg %p139
      // Predicated region
      $region25: #{tpu_custom_call.1} parent=5 // pred_check
        _
      $region26: #{tpu_custom_call.1} parent=5 // pred_check_branch
        %142 = sbr.rel (%p139) target = $region28
      $region27: #{tpu_custom_call.1} parent=5 // pred_region
        %s143 = ssub.s32 %s12, 1
        %s144 = sand.u32 %s25, 1
        %s145 = scalar_lea.sflag [#allocation3], %s144
        %s146 = sand.u32 %s25, 1
        %s147 = smul.addr %s146, 8
        %s148 = scalar_lea.vmem [#allocation2], %s147
        // Predicated region
        $region29: #{tpu_custom_call.1} parent=27 // pred_check
          %p149 = pneg %p38
        $region30: #{tpu_custom_call.1} parent=27 // pred_check_branch
          %151 = sbr.rel (%p149) target = $region32
        $region31: #{tpu_custom_call.1} parent=27 // pred_region
          %153 = dma.done %s145, 128
        $region32: #{tpu_custom_call.1} parent=27 // pred_fallthru
          _
        // Predicated region
        $region33: #{tpu_custom_call.1} parent=27 // pred_check
          %p154 = pneg %p59
        $region34: #{tpu_custom_call.1} parent=27 // pred_check_branch
          %156 = sbr.rel (%p154) target = $region36
        $region35: #{tpu_custom_call.1} parent=27 // pred_region
          %158 = dma.done [#allocation5], 256
        $region36: #{tpu_custom_call.1} parent=27 // pred_fallthru
          _
        %s159 = sand.u32 %s25, 1
        %s160 = scalar_lea.sflag [#allocation3], %s159
        %s161 = sand.u32 %s25, 1
        %s162 = smul.addr %s161, 8
        %s163 = scalar_lea.vmem [#allocation2], %s162
        %p164 = pneg %p38
        %p165 = pneg %p35
        %p166 = pneg %p59
        %p167 = pneg %p56
        %p168 = pneg %p85
        %p169 = pneg %p82
        %p170 = scmp.lt.s32.totalorder %s17, 1
        %s171 = scalar_select %p170, %s17, 1
        %s172 = smul.addr %s171, 8
        %s173 = scalar_lea.vmem %s2, %s172
        %p174 = scmp.lt.s32.totalorder %s17, 1
        %s175 = scalar_select %p174, %s17, 1
        %s176 = smul.addr %s175, 8
        %s177 = scalar_lea.vmem %s2, %s176
        %v178 = vld [vmem:[%s148] sm:$0xff]
        %v179 = vld [vmem:[#allocation4] sm:$0xff]
        %v180 = vld [vmem:[#allocation4 + $0x8] sm:$0xff]
        %v181 = vmul.f32 %v178, %v178
        %vm182 = vcmask 261120
        %v183 = vsel %vm182, %v181, 0.0
        %184 = vadd.xlane.f32.xlu0 %v183
        %v185 = vpop.xlane.xlu0 %184
        %v186 = vrsqrt.pop %v185
        %v187 = vmul.f32 %v186, %v185
        %v188 = vmul.f32 %v187, %v186
        %v189 = vmul.f32 0.5, %v188
        %v190 = vsub.f32 1.5, %v189
        %v191 = vmul.f32 %v186, %v190
        %vm192 = vweird.f32 %v185
        %vm193 = vweird.f32 %v186
        %vm194 = vmor %vm192, %vm193
        %v195 = vsel %vm194, %v186, %v191
        %v196 = vmin.f32 %v195, 1e+12
        %v197 = vmul.f32 %v179, %v179
        %v198 = vmul.f32 %v180, %v180
        %v199 = vsel %vm182, %v197, 0.0
        %200 = vadd.xlane.f32.xlu0 %v199
        %v201 = vpop.xlane.xlu0 %200
        %v202 = vsel %vm182, %v198, 0.0
        %203 = vadd.xlane.f32.xlu0 %v202
        %v204 = vpop.xlane.xlu0 %203
        %v205 = vrsqrt.pop %v201
        %v206 = vmul.f32 %v205, %v201
        %v207 = vmul.f32 %v206, %v205
        %v208 = vmul.f32 0.5, %v207
        %v209 = vsub.f32 1.5, %v208
        %v210 = vmul.f32 %v205, %v209
        %vm211 = vweird.f32 %v201
        %vm212 = vweird.f32 %v205
        %vm213 = vmor %vm211, %vm212
        %v214 = vsel %vm213, %v205, %v210
        %v215 = vrsqrt.pop %v204
        %v216 = vmul.f32 %v215, %v204
        %v217 = vmul.f32 %v216, %v215
        %v218 = vmul.f32 0.5, %v217
        %v219 = vsub.f32 1.5, %v218
        %v220 = vmul.f32 %v215, %v219
        %vm221 = vweird.f32 %v204
        %vm222 = vweird.f32 %v215
        %vm223 = vmor %vm221, %vm222
        %v224 = vsel %vm223, %v215, %v220
        %v225 = vmin.f32 %v214, 1e+12
        %v226 = vmin.f32 %v224, 1e+12
        %v227 = vmul.f32 %v196, 1.4142135
        %v228 = vmul.f32 %v178, %v227
        %v229 = vmul.f32 %v225, 1.4142135
        %v230 = vmul.f32 %v226, 1.4142135
        %v231 = vmul.f32 %v179, %v229
        %v232 = vmul.f32 %v180, %v230
        %v234 = vsel %vm182, %v228, 0
        %v237 = vsel %vm182, %v231, 0
        %v240 = vsel %vm182, %v232, 0
        %242 = vmatpush.xpose.msra.mxu0 0.0
        %243 = vmatpush.xpose.msra.mxu0 0.0
        %244 = vmatpush.xpose.msra.mxu0 0.0
        %245 = vmatpush.xpose.msra.mxu0 0.0
        %246 = vmatpush.xpose.msra.mxu0 0.0
        %247 = vmatpush.xpose.msra.mxu0 0.0
        %248 = vmatpush.xpose.msra.mxu0 0.0
        %249 = vmatpush.xpose.msra.mxu0 0.0
        %250 = vmatpush.xpose.msra.mxu0 0.0
        %251 = vmatpush.xpose.msra.mxu0 0.0
        %252 = vmatpush.xpose.msra.mxu0 0.0
        %253 = vmatpush.xpose.msra.mxu0 0.0
        %254 = vmatpush.xpose.msra.mxu0 0.0
        %255 = vmatpush.xpose.msra.mxu0 0.0
        %256 = vmatpush.xpose.msra.mxu0 %v240
        %257 = vmatpush.xpose.msra.mxu0 %v237
        %258 = vmatmul.f32.gmra.mxu0 %v234
        %v259 = vpop.f32.mrf.mxu0
        %v260 = vadd.f32 0.0, %v259
        %261 = vdwg.mxu0
        %s262 = smul.u32 %s17, 8
        %v263 = vlaneseq
        %v264 = vshrl.u32 %v263, 7
        %v265 = vstv %s262
        %v266 = vadd.s32 %v265, %v264
        %v267 = vlaneseq
        %v268 = vand.u32 %v267, 127
        %vm269 = vcmp.lt.s32.totalorder %v266, 8
        %v270 = vadd.s32 %v266, 8
        %v271 = vsub.s32 %v266, 8
        %v272 = vsel %vm269, %v270, %v271
        %vm273 = vcmp.eq.s32.totalorder %v268, %v272
        %v274 = vsel %vm273, %v260, 0.0
        %vm275 = vcmask 130048
        %v276 = vsel %vm275, %v274, 0.0
        %277 = vadd.xlane.f32.xlu0 %v276
        %v278 = vpop.xlane.xlu0 %277
        %vm279 = vcmp.eq.s32.totalorder %v268, %v266
        %v280 = vsel %vm279, -inf, %v260
        %v281 = vsel %vm275, %v280, -inf
        %282 = vmax.xlane.f32.xlu0 %v281
        %v283 = vpop.xlane.xlu0 %282
        %v284 = vsub.f32 %v280, %v283
        %v285 = vmul.f32 %v284, 1.442695
        %v286 = vpow.pop %v285
        %v287 = vsel %vm275, %v286, 0.0
        %288 = vadd.xlane.f32.xlu0 %v287
        %v289 = vpop.xlane.xlu0 %288
        %v290 = vlog2.pop %v289
        %v291 = vmul.f32 %v290, 0.6931472
        %v292 = vadd.f32 %v283, %v291
        %v293 = vsub.f32 %v292, %v278
        %vm294 = vcmask 7168
        %295 = vst.msk [vmem:[%s177] sm:$0xff] %vm294, %v293
        %p296 = scmp.lt.s32.totalorder %s17, 1
        %s297 = scalar_select %p296, %s17, 1
        %s298 = smul.addr %s297, 8
        %s299 = scalar_lea.vmem %s2, %s298
        // Predicated region
        $region37: #{tpu_custom_call.1} parent=27 // pred_check
          %p300 = pneg %p82
        $region38: #{tpu_custom_call.1} parent=27 // pred_check_branch
          %302 = sbr.rel (%p300) target = $region40
        $region39: #{tpu_custom_call.1} parent=27 // pred_region
          _
        $region40: #{tpu_custom_call.1} parent=27 // pred_fallthru
          _
      $region28: #{tpu_custom_call.1} parent=5 // pred_fallthru
        _
      %p303 = scmp.le.s32.totalorder 2, %s12
      // Predicated region
      $region41: #{tpu_custom_call.1} parent=5 // pred_check
        %p304 = pneg %p303
      $region42: #{tpu_custom_call.1} parent=5 // pred_check_branch
        %306 = sbr.rel (%p304) target = $region44
      $region43: #{tpu_custom_call.1} parent=5 // pred_region
        %s307 = ssub.s32 %s12, 2
        // Predicated region
        $region45: #{tpu_custom_call.1} parent=43 // pred_check
          %p308 = pneg %p88
        $region46: #{tpu_custom_call.1} parent=43 // pred_check_branch
          %310 = sbr.rel (%p308) target = $region48
        $region47: #{tpu_custom_call.1} parent=43 // pred_region
          %p311 = scmp.lt.s32.totalorder %s18, 1
          %s312 = scalar_select %p311, %s18, 1
          %s313 = smul.addr %s312, 8
          %s314 = scalar_lea.vmem %s2, %s313
        $region48: #{tpu_custom_call.1} parent=43 // pred_fallthru
          _
      $region44: #{tpu_custom_call.1} parent=5 // pred_fallthru
        _
    $region6: #{tpu_custom_call.1} parent=1 // loop_footer
      %s16 = sadd.s32 1, %s12
    $region7: #{tpu_custom_call.1} parent=1 // loop_footer_branch
      %11 = sbr.rel target = $region3
    $region8: #{tpu_custom_call.1} parent=1 // loop_exit
      _
    %315 = vsyncpa [#allocation3], 1
    %s316 = scalar_lea.sflag [#allocation3], 1
    %317 = vsyncpa %s316, 1
    %318 = vsyncpa [#allocation5], 1

</llo_original>
